<compile_context>
chip_gen: v6e
topology: v6e:2x2x1
jax: 0.10.0
libtpu: 0.0.40
codegen_flags: <defaults>
</compile_context>

<pallas_src>
import functools

import jax
import jax.numpy as jnp
from jax.experimental import pallas as pl
from jax.experimental.pallas import tpu as pltpu


# ----------------------------------------------------------------------------
# QKV 1x1 conv kernel:  out[:, oc, s] = sum_ic W[oc, ic] * x[:, ic, s]
# ----------------------------------------------------------------------------
def _qkv_kernel(x_ref, w_ref, o_ref):
    # x_ref: (C, TS), w_ref: (3C, C), o_ref: (3C, TS)   (lane-dense output)
    o_ref[...] = jnp.dot(
        w_ref[...], x_ref[...], preferred_element_type=jnp.float32
    ).astype(o_ref.dtype)


def qkv_project_pallas(x3, w, *, spatial_tile=2048):
    # x3: (b, C, HW) channels-on-sublane, spatial on lane.  w: (3C, C).
    b, C, HW = x3.shape
    C3 = w.shape[0]
    TS = HW if HW <= spatial_tile else spatial_tile   # spatial_tile % 128 == 0
    grid = (b, pl.cdiv(HW, TS))
    cost = pl.CostEstimate(
        flops=int(2 * b * HW * C * C3),
        transcendentals=0,
        bytes_accessed=int(x3.dtype.itemsize * (x3.size + w.size + b * C3 * HW)),
    )
    return pl.pallas_call(
        _qkv_kernel,
        out_shape=jax.ShapeDtypeStruct((b, C3, HW), x3.dtype),
        grid_spec=pltpu.PrefetchScalarGridSpec(
            num_scalar_prefetch=0,
            grid=grid,
            in_specs=[
                pl.BlockSpec((pl.Squeezed(), C, TS), lambda bi, si: (bi, 0, si)),
                pl.BlockSpec((C3, C), lambda bi, si: (0, 0)),
            ],
            out_specs=pl.BlockSpec((pl.Squeezed(), C3, TS),
                                   lambda bi, si: (bi, 0, si)),
        ),
        compiler_params=pltpu.CompilerParams(
            dimension_semantics=("parallel", "parallel"),
            vmem_limit_bytes=32 * 1024 * 1024,
        ),
        cost_estimate=cost,
    )(x3, w)


# ----------------------------------------------------------------------------
# Attention kernel: TB halo windows per grid step, all heads inside the kernel.
#   q_ref: (TB, C, Lq), k_ref/v_ref: (TB, C, Lk)  (rel bias already folded in k)
#   o_ref: (TB, C, Lq)
# ----------------------------------------------------------------------------
def _esa_attn_kernel(q_ref, k_ref, v_ref, o_ref, *, num_heads, head_ch, scale,
                     compute_dtype):
    for hd in range(num_heads):
        lo = hd * head_ch
        hi = lo + head_ch
        qh = q_ref[:, lo:hi, :].astype(jnp.float32) * scale      # (TB, d, Lq)
        kh = k_ref[:, lo:hi, :].astype(jnp.float32)              # (TB, d, Lk)
        # sim[b, q, k] = sum_d q[b, d, q] * k[b, d, k]
        sim = jnp.einsum("bdq,bdk->bqk",
                         qh.astype(compute_dtype), kh.astype(compute_dtype),
                         preferred_element_type=jnp.float32)     # (TB, Lq, Lk)
        sim = sim - jnp.max(sim, axis=-1, keepdims=True)
        p = jnp.exp(sim)
        attn = p / jnp.sum(p, axis=-1, keepdims=True)            # f32 softmax
        vh = v_ref[:, lo:hi, :].astype(compute_dtype)            # (TB, d, Lk)
        # out[b, d, q] = sum_k v[b, d, k] * attn[b, q, k]   (natural output order)
        oh = jnp.einsum("bdk,bqk->bdq", vh, attn.astype(compute_dtype),
                        preferred_element_type=jnp.float32)      # (TB, d, Lq)
        o_ref[:, lo:hi, :] = oh.astype(o_ref.dtype)


def esa_attention_pallas(qb, kb, vb, *, num_heads, scale,
                         windows_per_step=16, compute_dtype=jnp.float32):
    Bw, C, Lq = qb.shape
    Lk = kb.shape[2]
    head_ch = C // num_heads
    TB = min(windows_per_step, Bw)
    grid = (pl.cdiv(Bw, TB),)

    kernel = functools.partial(_esa_attn_kernel, num_heads=num_heads,
                               head_ch=head_ch, scale=scale,
                               compute_dtype=compute_dtype)
    cost = pl.CostEstimate(
        flops=int(4 * Bw * num_heads * Lq * Lk * head_ch),
        transcendentals=int(Bw * num_heads * Lq * Lk),
        bytes_accessed=int(qb.dtype.itemsize *
                           (qb.size + kb.size + vb.size + Bw * C * Lq)),
    )
    return pl.pallas_call(
        kernel,
        out_shape=jax.ShapeDtypeStruct((Bw, C, Lq), qb.dtype),
        grid_spec=pltpu.PrefetchScalarGridSpec(
            num_scalar_prefetch=0,
            grid=grid,
            in_specs=[
                pl.BlockSpec((TB, C, Lq), lambda i: (i, 0, 0)),
                pl.BlockSpec((TB, C, Lk), lambda i: (i, 0, 0)),
                pl.BlockSpec((TB, C, Lk), lambda i: (i, 0, 0)),
            ],
            out_specs=pl.BlockSpec((TB, C, Lq), lambda i: (i, 0, 0)),
        ),
        compiler_params=pltpu.CompilerParams(
            dimension_semantics=("parallel",),
            vmem_limit_bytes=32 * 1024 * 1024,
        ),
        cost_estimate=cost,
    )(qb, kb, vb)


# ----------------------------------------------------------------------------
# ESA forward (layout glue in plain JAX, hot paths in Pallas)
# ----------------------------------------------------------------------------
def esa_forward(x, params, *, block_size=8, halo_size=3, num_heads=4,
                use_pallas=True, windows_per_step=16,
                compute_dtype=jnp.float32):
    b, c, oh_, ow_ = x.shape
    head_ch = c // num_heads
    assert c % num_heads == 0

    # pad H, W to multiples of block_size (reflect, like F.pad(..., 'reflect'))
    pad_r = (block_size - ow_ % block_size) % block_size
    pad_b = (block_size - oh_ % block_size) % block_size
    if pad_r > 0 or pad_b > 0:
        x = jnp.pad(x, ((0, 0), (0, 0), (0, pad_b), (0, pad_r)), mode="reflect")
    _, _, h, w = x.shape
    nh, nw = h // block_size, w // block_size
    win = block_size + 2 * halo_size
    Lq = block_size * block_size
    Lk = win * win
    Bw = b * nh * nw

    # --- qkv 1x1 conv (no bias), channels-first matmul ---
    # TODO(synk): qkv conv bias (module flag bias=True) not implemented; default is False.
    x3 = x.reshape(b, c, h * w)
    w_qkv = params["w_qkv"]                                   # (3c, c)
    if use_pallas:
        qkv = qkv_project_pallas(x3, w_qkv)
    else:
        qkv = jnp.einsum("oi,bis->bos", w_qkv, x3)
    qkv = qkv.reshape(b, 3 * c, h, w)
    q, k, v = jnp.split(qkv, 3, axis=1)

    # --- q: 'b c (nh k1) (nw k2) -> (b nh nw) c (k1 k2)' ---
    qb = q.reshape(b, c, nh, block_size, nw, block_size)
    qb = qb.transpose(0, 2, 4, 1, 3, 5).reshape(Bw, c, Lq)

    # --- k, v: F.unfold(kernel=win, stride=block, padding=halo), zero pad ---
    # TODO(synk): halo windows are still gathered in XLA (≈3x K/V duplication);
    # an in-kernel manual-DMA halo gather would remove that traffic.
    def unfold(t):
        tp = jnp.pad(t, ((0, 0), (0, 0),
                         (halo_size, halo_size), (halo_size, halo_size)))
        rows = (jnp.arange(nh) * block_size)[:, None] + jnp.arange(win)[None, :]
        cols = (jnp.arange(nw) * block_size)[:, None] + jnp.arange(win)[None, :]
        patches = tp[:, :, rows[:, None, :, None], cols[None, :, None, :]]
        # (b, c, nh, nw, win, win) -> (b nh nw) c (win*win)
        return patches.transpose(0, 2, 3, 1, 4, 5).reshape(Bw, c, Lk)

    kb = unfold(k)
    vb = unfold(v)

    # --- relative position bias folded into K once (same for every head) ---
    rel_h = params["rel_h"]                                   # (1, win, 1, d/2)
    rel_w = params["rel_w"]                                   # (1, 1, win, d/2)
    rel = jnp.concatenate(
        [jnp.broadcast_to(rel_h, (1, win, win, head_ch // 2)),
         jnp.broadcast_to(rel_w, (1, win, win, head_ch // 2))], axis=-1)
    rel = rel.reshape(Lk, head_ch).T                          # (d, Lk)
    rel_c = jnp.tile(rel, (num_heads, 1)).astype(kb.dtype)    # (c, Lk) head-major
    kb = kb + rel_c[None]

    scale = float(head_ch) ** (-0.5)

    # --- attention hot path ---
    if use_pallas:
        ob = esa_attention_pallas(qb, kb, vb, num_heads=num_heads, scale=scale,
                                  windows_per_step=windows_per_step,
                                  compute_dtype=compute_dtype)
    else:
        qh = qb.reshape(Bw, num_heads, head_ch, Lq)
        kh = kb.reshape(Bw, num_heads, head_ch, Lk)
        vh = vb.reshape(Bw, num_heads, head_ch, Lk)
        sim = jnp.einsum("bhdq,bhdk->bhqk", qh * scale, kh)
        attn = jax.nn.softmax(sim, axis=-1)
        ohd = jnp.einsum("bhqk,bhdk->bhdq", attn, vh)
        ob = ohd.reshape(Bw, c, Lq)

    # --- '(b nh nw) c (k1 k2) -> b c (nh k1) (nw k2)' ---
    out = ob.reshape(b, nh, nw, c, block_size, block_size)
    out = out.transpose(0, 3, 1, 4, 2, 5).reshape(b, c, h, w)

    if pad_r > 0 or pad_b > 0:
        out = out[:, :, :oh_, :ow_]
    return out


# ----------------------------------------------------------------------------
# main
# ----------------------------------------------------------------------------
if __name__ == "__main__":
    key = jax.random.PRNGKey(0)
    b, ch, H, W = 2, 16, 16, 16
    block_size, halo_size, num_heads = 8, 3, 4
    head_ch = ch // num_heads
    win = block_size + 2 * halo_size

    k_x, k_w, k_rh, k_rw = jax.random.split(key, 4)
    x = jax.random.normal(k_x, (b, ch, H, W), dtype=jnp.float32)

    params = {
        # conv weight (3c, c, 1, 1) squeezed to (3c, c), matching PyTorch layout
        "w_qkv": jax.random.normal(k_w, (3 * ch, ch), dtype=jnp.float32) * 0.1,
        "rel_h": jax.random.normal(k_rh, (1, win, 1, head_ch // 2),
                                   dtype=jnp.float32),
        "rel_w": jax.random.normal(k_rw, (1, 1, win, head_ch // 2),
                                   dtype=jnp.float32),
    }
    # TODO(synk): sr > 1 branch (MaxPool2d sampler + depthwise conv + bilinear
    # Interpolate) not implemented; module default sr=1 never takes it.

    out = esa_forward(x, params, block_size=block_size, halo_size=halo_size,
                      num_heads=num_heads, use_pallas=True)
    out = jax.block_until_ready(out)

    # pure-JAX reference for correctness (f32 everywhere)
    ref = esa_forward(x, params, block_size=block_size, halo_size=halo_size,
                      num_heads=num_heads, use_pallas=False)
    ref = jax.block_until_ready(ref)

    assert out.shape == (b, ch, H, W), out.shape
    err = float(jnp.max(jnp.abs(out - ref)))
    assert jnp.allclose(out, ref, atol=1e-4, rtol=1e-4), err

    print("KERNEL_OK")
</pallas_src>

<mosaic_0001>
module attributes {stable_mosaic.version = 11 : i64} {
  func.func @_qkv_kernel(%arg0: i32, %arg1: i32, %arg2: memref<1x16x256xf32, #tpu.memory_space<vmem>>, %arg3: memref<48x16xf32, #tpu.memory_space<vmem>>, %arg4: memref<1x48x256xf32, #tpu.memory_space<vmem>>) attributes {dimension_semantics = [#tpu.dimension_semantics<parallel>, #tpu.dimension_semantics<parallel>], iteration_bounds = array<i64: 2, 1>, scalar_prefetch = 0 : i64, scratch_operands = 0 : i64, tpu.core_type = #tpu.core_type<tc>, window_params = [{transform_indices = @transform_0, window_bounds = array<i64: 1, 16, 256>}, {pipeline_mode = #tpu.pipeline_mode<synchronous>, transform_indices = @transform_1, window_bounds = array<i64: 48, 16>}, {transform_indices = @transform_2, window_bounds = array<i64: 1, 48, 256>}]} {
    %c0 = arith.constant 0 : index
    %c0_0 = arith.constant 0 : index
    %0 = vector.load %arg3[%c0, %c0_0] : memref<48x16xf32, #tpu.memory_space<vmem>>, vector<48x16xf32>
    %c0_1 = arith.constant 0 : index
    %c0_2 = arith.constant 0 : index
    %c0_3 = arith.constant 0 : index
    %1 = vector.load %arg2[%c0_1, %c0_2, %c0_3] : memref<1x16x256xf32, #tpu.memory_space<vmem>>, vector<1x16x256xf32>
    %2 = vector.shape_cast %1 : vector<1x16x256xf32> to vector<16x256xf32>
    %cst = arith.constant dense<0.000000e+00> : vector<48x256xf32>
    %3 = tpu.matmul %0, %2, %cst {dimension_numbers = #tpu.dot_dimension_numbers<[1], [0], [0], [1], [0, 0, 1, 1], [], []>} : vector<48x16xf32>, vector<16x256xf32>, vector<48x256xf32> -> vector<48x256xf32>
    %c0_4 = arith.constant 0 : index
    %c0_5 = arith.constant 0 : index
    %c0_6 = arith.constant 0 : index
    %4 = vector.load %arg4[%c0_4, %c0_5, %c0_6] : memref<1x48x256xf32, #tpu.memory_space<vmem>>, vector<1x48x256xf32>
    %5 = vector.shape_cast %4 : vector<1x48x256xf32> to vector<48x256xf32>
    %6 = vector.shape_cast %3 : vector<48x256xf32> to vector<1x48x256xf32>
    tpu.vector_store %arg4[%c0_4, %c0_5, %c0_6], %6 {strides = array<i32>} : memref<1x48x256xf32, #tpu.memory_space<vmem>>, vector<1x48x256xf32>,
    return
  }
  func.func @transform_0(%arg0: i32, %arg1: i32) -> (i32, i32, i32) {
    %c0_i32 = arith.constant 0 : i32
    %c0_i32_0 = arith.constant 0 : i32
    return %arg0, %c0_i32, %arg1 : i32, i32, i32
  }
  func.func @transform_1(%arg0: i32, %arg1: i32) -> (i32, i32) {
    %c0_i32 = arith.constant 0 : i32
    %c0_i32_0 = arith.constant 0 : i32
    %c0_i32_1 = arith.constant 0 : i32
    return %c0_i32, %c0_i32_0 : i32, i32
  }
  func.func @transform_2(%arg0: i32, %arg1: i32) -> (i32, i32, i32) {
    %c0_i32 = arith.constant 0 : i32
    %c0_i32_0 = arith.constant 0 : i32
    return %arg0, %c0_i32, %arg1 : i32, i32, i32
  }
}

</mosaic_0001>

<llo_original>
// kernel: tpu_custom_call.1
$region0: #{tpu_custom_call.1}
  #allocation0 [shape = 'u32[]', space=smem, size = 0x4, offset = 0x4, fixed_abs, tag = 'smem constant byte address 0x4 - core index']
  #allocation1 [shape = 'u32[144,128]{1,0:T(1,128)}', space=vmem, size = 0x12000, scoped, tag = 'internal scratch']
  %s0 = inlined_call_operand.vmem [shape: f32[2,16,256], index: 0, kind: input, shape index: {}]
  %s1 = inlined_call_operand.vmem [shape: f32[48,16], index: 1, kind: input, shape index: {}]
  %s2 = inlined_call_operand.hbm [shape: f32[2,48,256], index: 2, kind: output, shape index: {}]
  %s3 = sld [smem:[#allocation0]]
  $region41: #{tpu_custom_call.1} parent=0
    _
  %s5 = ssub.s32 1, %s3
  %s6 = scalar_select 0, %s5, %s3
  $region1: #{tpu_custom_call.1} parent=0
    #allocation2 [shape = 'u8[98304]{0}', space=vmem, size = 0x18000, scoped, tag = 'output window, operand 0']
    #allocation3 [shape = 's32[2]{0}', space=sflag, size = 0x8, scoped, tag = 'scoped memory for tpu_custom_call.1']
    %7 = vsyncpa [#allocation3], 0
    %s8 = scalar_lea.sflag [#allocation3], 1
    %9 = vsyncpa %s8, 0
    loop: start=0, step=1, limit=4
    $region2: #{tpu_custom_call.1} parent=1 // loop_pre_header
      _
    $region3: #{tpu_custom_call.1} parent=1 // loop_header
      %s11 = sphi 0, %s15
      %p12 = scmp.ge.s32.totalorder %s11, 4
      %s18 = sphi 0, %s30
      %s19 = sphi 0, %s26
      %s20 = sphi 0, %s18
      %s21 = sphi 0, %s19
      %s22 = sphi 0, %s20
      %s23 = sphi 0, %s21
      %s35 = sphi 0, %s37
      %s38 = sphi 0, %s35
      %s39 = sphi 0, %s38
      %s55 = sphi 0, %s39
      %s59 = sphi 0, %s59
      %s61 = sphi 0, %s59
      %s62 = sphi 0, %s61
      %s76 = sphi 0, %s62
      %s84 = sphi 0, %s86
      %s87 = sphi 0, %s84
      %s88 = sphi 0, %s87
      %s104 = sphi 0, %s88
    $region4: #{tpu_custom_call.1} parent=1 // loop_header_branch
      %14 = sbr.rel (%p12) target = $region8
    $region5: #{tpu_custom_call.1} parent=1 // loop_body
      %s16 = ssub.s32 %s11, 1
      %s17 = ssub.s32 %s11, 2
      %s24 = sadd.s32 1, %s19
      %p25 = scmp.ge.s32.totalorder %s24, 1
      %s26 = scalar_select %p25, 0, %s24
      %s27 = sadd.s32 1, %s18
      %s28 = scalar_select %p25, %s27, %s18
      %p29 = scmp.ge.s32.totalorder %s28, 2
      %s30 = scalar_select %p29, 0, %s28
      %s31 = ssub.s32 %s18, %s30
      %s32 = ssub.s32 %s19, %s26
      %s33 = sor.u32 %s31, %s32
      %p34 = scmp.eq.s32.totalorder %s33, 0
      %s36 = sadd.s32 %s35, 1
      %s37 = scalar_select %p34, %s35, %s36
      %p40 = pneg %p34
      %p41 = scmp.eq.s32.totalorder %s11, 1
      %p42 = por %p40, %p41
      %p43 = scmp.ne.s32.totalorder %s35, %s38
      %p44 = scmp.eq.s32.totalorder %s11, 0
      %p45 = por %p43, %p44
      %p46 = scmp.ne.s32.totalorder %s35, %s38
      %p47 = scmp.eq.s32.totalorder %s16, 1
      %p48 = por %p46, %p47
      %p49 = scmp.ne.s32.totalorder %s38, %s39
      %p50 = scmp.eq.s32.totalorder %s16, 0
      %p51 = por %p49, %p50
      %p52 = scmp.ne.s32.totalorder %s38, %s39
      %p53 = scmp.eq.s32.totalorder %s17, 1
      %p54 = por %p52, %p53
      %p56 = scmp.ne.s32.totalorder %s39, %s55
      %p57 = scmp.eq.s32.totalorder %s17, 0
      %p58 = por %p56, %p57
      %s60 = sadd.s32 %s59, 1
      %p63 = scmp.eq.s32.totalorder %s11, 1
      %p64 = scmp.ne.s32.totalorder %s59, %s61
      %p65 = scmp.eq.s32.totalorder %s11, 0
      %p66 = por %p64, %p65
      %p67 = scmp.ne.s32.totalorder %s59, %s61
      %p68 = scmp.eq.s32.totalorder %s16, 1
      %p69 = por %p67, %p68
      %p70 = scmp.ne.s32.totalorder %s61, %s62
      %p71 = scmp.eq.s32.totalorder %s16, 0
      %p72 = por %p70, %p71
      %p73 = scmp.ne.s32.totalorder %s61, %s62
      %p74 = scmp.eq.s32.totalorder %s17, 1
      %p75 = por %p73, %p74
      %p77 = scmp.ne.s32.totalorder %s62, %s76
      %p78 = scmp.eq.s32.totalorder %s17, 0
      %p79 = por %p77, %p78
      %s80 = ssub.s32 %s18, %s30
      %s81 = ssub.s32 %s19, %s26
      %s82 = sor.u32 %s80, %s81
      %p83 = scmp.eq.s32.totalorder %s82, 0
      %s85 = sadd.s32 %s84, 1
      %s86 = scalar_select %p83, %s84, %s85
      %p89 = pneg %p83
      %p90 = scmp.eq.s32.totalorder %s11, 1
      %p91 = por %p89, %p90
      %p92 = scmp.ne.s32.totalorder %s84, %s87
      %p93 = scmp.eq.s32.totalorder %s11, 0
      %p94 = por %p92, %p93
      %p95 = scmp.ne.s32.totalorder %s84, %s87
      %p96 = scmp.eq.s32.totalorder %s16, 1
      %p97 = por %p95, %p96
      %p98 = scmp.ne.s32.totalorder %s87, %s88
      %p99 = scmp.eq.s32.totalorder %s16, 0
      %p100 = por %p98, %p99
      %p101 = scmp.ne.s32.totalorder %s87, %s88
      %p102 = scmp.eq.s32.totalorder %s17, 1
      %p103 = por %p101, %p102
      %p105 = scmp.ne.s32.totalorder %s88, %s104
      %p106 = scmp.eq.s32.totalorder %s17, 0
      %p107 = por %p105, %p106
      %p108 = scmp.le.s32.totalorder 1, %s11
      %p109 = scmp.lt.s32.totalorder %s11, 3
      %p110 = pnand %p108, %p109
      %p111 = pneg %p110
      // Predicated region
      $region9: #{tpu_custom_call.1} parent=5 // pred_check
        _
      $region10: #{tpu_custom_call.1} parent=5 // pred_check_branch
        %113 = sbr.rel (%p110) target = $region12
      $region11: #{tpu_custom_call.1} parent=5 // pred_region
        %s114 = ssub.s32 %s11, 1
        // Predicated region
        $region13: #{tpu_custom_call.1} parent=11 // pred_check
          %p115 = pneg %p72
        $region14: #{tpu_custom_call.1} parent=11 // pred_check_branch
          %117 = sbr.rel (%p115) target = $region16
        $region15: #{tpu_custom_call.1} parent=11 // pred_region
          _
        $region16: #{tpu_custom_call.1} parent=11 // pred_fallthru
          _
      $region12: #{tpu_custom_call.1} parent=5 // pred_fallthru
        _
      %p118 = scmp.lt.s32.totalorder %s11, 2
      // Predicated region
      $region17: #{tpu_custom_call.1} parent=5 // pred_check
        %p119 = pneg %p118
      $region18: #{tpu_custom_call.1} parent=5 // pred_check_branch
        %121 = sbr.rel (%p119) target = $region20
      $region19: #{tpu_custom_call.1} parent=5 // pred_region
        // Predicated region
        $region21: #{tpu_custom_call.1} parent=19 // pred_check
          %p122 = pneg %p45
        $region22: #{tpu_custom_call.1} parent=19 // pred_check_branch
          %124 = sbr.rel (%p122) target = $region24
        $region23: #{tpu_custom_call.1} parent=19 // pred_region
          %s125 = smul.u32 2, %s19
          %p126 = scmp.lt.s32.totalorder %s18, 1
          %s127 = scalar_select %p126, %s18, 1
          %p128 = scmp.lt.s32.totalorder %s125, 1
          %s129 = scalar_select %p128, %s125, 1
          %s130 = smul.addr %s127, 4
          %s131 = sadd.s32 %s129, %s130
          %s132 = smul.addr %s131, 8
          %s133 = scalar_lea.vmem %s0, %s132
          %s134 = smul.u32 2, %s19
        $region24: #{tpu_custom_call.1} parent=19 // pred_fallthru
          _
      $region20: #{tpu_custom_call.1} parent=5 // pred_fallthru
        _
      %p135 = scmp.le.s32.totalorder 1, %s11
      %p136 = scmp.lt.s32.totalorder %s11, 3
      %p137 = pnand %p135, %p136
      %p138 = pneg %p137
      // Predicated region
      $region25: #{tpu_custom_call.1} parent=5 // pred_check
        _
      $region26: #{tpu_custom_call.1} parent=5 // pred_check_branch
        %140 = sbr.rel (%p137) target = $region28
      $region27: #{tpu_custom_call.1} parent=5 // pred_region
        %s141 = ssub.s32 %s11, 1
        %s142 = smul.u32 2, %s21
        %p143 = scmp.lt.s32.totalorder %s20, 1
        %s144 = scalar_select %p143, %s20, 1
        %p145 = scmp.lt.s32.totalorder %s142, 1
        %s146 = scalar_select %p145, %s142, 1
        %s147 = smul.addr %s144, 4
        %s148 = sadd.s32 %s146, %s147
        %s149 = smul.addr %s148, 8
        %s150 = scalar_lea.vmem %s0, %s149
        %p151 = pneg %p51
        %p152 = pneg %p48
        %p153 = pneg %p72
        %p154 = pneg %p69
        %p155 = pneg %p100
        %p156 = pneg %p97
        %s157 = sand.u32 %s87, 1
        %s158 = scalar_lea.sflag [#allocation3], %s157
        %s159 = sand.u32 %s87, 1
        %s160 = smul.addr %s159, 96
        %s161 = scalar_lea.vmem [#allocation2], %s160
        %s162 = smul.u32 2, %s21
        %p163 = scmp.lt.s32.totalorder %s20, 1
        %s164 = scalar_select %p163, %s20, 1
        %p165 = scmp.lt.s32.totalorder %s162, 1
        %s166 = scalar_select %p165, %s162, 1
        %s167 = smul.addr %s164, 4
        %s168 = sadd.s32 %s166, %s167
        %s169 = smul.addr %s168, 8
        %s170 = scalar_lea.vmem %s0, %s169
        %s171 = smul.u32 2, %s21
        %s172 = smul.u32 2, %s21
        %v173 = vld [vmem:[%s1] sm:$0xff]
        %v174 = vld [vmem:[%s1 + $0x8] sm:$0xff]
        %v175 = vld [vmem:[%s1 + $0x10] sm:$0xff]
        %v176 = vld [vmem:[%s1 + $0x18] sm:$0xff]
        %v177 = vld [vmem:[%s1 + $0x20] sm:$0xff]
        %v178 = vld [vmem:[%s1 + $0x28] sm:$0xff]
        %v179 = vld [vmem:[%s170] sm:$0xff]
        %v180 = vld [vmem:[%s170 + $0x8] sm:$0xff]
        %v181 = vld [vmem:[%s170 + $0x10] sm:$0xff]
        %v182 = vld [vmem:[%s170 + $0x18] sm:$0xff]
        %vm183 = vcmask 130048
        %v185 = vsel %vm183, %v173, 0
        %v188 = vsel %vm183, %v174, 0
        %v191 = vsel %vm183, %v175, 0
        %v194 = vsel %vm183, %v176, 0
        %v197 = vsel %vm183, %v177, 0
        %v200 = vsel %vm183, %v178, 0
        %202 = vmatprep.subr.mxu0 0.0
        %203 = vmatpush1.msra.mxu0 0.0
        %204 = vmatprep.subr.mxu0 0.0
        %205 = vmatpush1.msra.mxu0 0.0
        %206 = vmatprep.subr.mxu0 0.0
        %207 = vmatpush1.msra.mxu0 0.0
        %208 = vmatprep.subr.mxu0 0.0
        %209 = vmatpush1.msra.mxu0 0.0
        %210 = vmatprep.subr.mxu0 0.0
        %211 = vmatpush1.msra.mxu0 0.0
        %212 = vmatprep.subr.mxu0 0.0
        %213 = vmatpush1.msra.mxu0 0.0
        %214 = vmatprep.subr.mxu0 0.0
        %215 = vmatpush1.msra.mxu0 0.0
        %216 = vmatprep.subr.mxu0 0.0
        %217 = vmatpush1.msra.mxu0 0.0
        %218 = vmatprep.subr.mxu0 0.0
        %219 = vmatpush1.msra.mxu0 0.0
        %220 = vmatprep.subr.mxu0 0.0
        %221 = vmatpush1.msra.mxu0 0.0
        %222 = vmatprep.subr.mxu0 0.0
        %223 = vmatpush1.msra.mxu0 0.0
        %224 = vmatprep.subr.mxu0 0.0
        %225 = vmatpush1.msra.mxu0 0.0
        %226 = vmatprep.subr.mxu0 0.0
        %227 = vmatpush1.msra.mxu0 0.0
        %228 = vmatprep.subr.mxu0 0.0
        %229 = vmatpush1.msra.mxu0 0.0
        %230 = vmatprep.subr.mxu0 %v182
        %231 = vmatpush1.msra.mxu0 %v181
        %232 = vmatprep.subr.mxu0 %v180
        %233 = vmatpush1.msra.mxu0 %v179
        %234 = vmatprep.subr.mxu0 0.0
        %235 = vmatpush2.msra.mxu0 0.0
        %236 = vmatprep.subr.mxu0 0.0
        %237 = vmatpush2.msra.mxu0 0.0
        %238 = vmatprep.subr.mxu0 0.0
        %239 = vmatpush2.msra.mxu0 0.0
        %240 = vmatprep.subr.mxu0 0.0
        %241 = vmatpush2.msra.mxu0 0.0
        %242 = vmatprep.subr.mxu0 0.0
        %243 = vmatpush2.msra.mxu0 0.0
        %244 = vmatprep.subr.mxu0 0.0
        %245 = vmatpush2.msra.mxu0 0.0
        %246 = vmatprep.subr.mxu0 0.0
        %247 = vmatpush2.msra.mxu0 0.0
        %248 = vmatprep.subr.mxu0 0.0
        %249 = vmatpush2.msra.mxu0 0.0
        %250 = vmatprep.subr.mxu0 0.0
        %251 = vmatpush2.msra.mxu0 0.0
        %252 = vmatprep.subr.mxu0 0.0
        %253 = vmatpush2.msra.mxu0 0.0
        %254 = vmatprep.subr.mxu0 0.0
        %255 = vmatpush2.msra.mxu0 0.0
        %256 = vmatprep.subr.mxu0 0.0
        %257 = vmatpush2.msra.mxu0 0.0
        %258 = vmatprep.subr.mxu0 0.0
        %259 = vmatpush2.msra.mxu0 0.0
        %260 = vmatprep.subr.mxu0 0.0
        %261 = vmatpush2.msra.mxu0 0.0
        %262 = vmatprep.subr.mxu0 0.0
        %263 = vmatpush2.msra.mxu0 0.0
        %264 = vmatprep.subr.mxu0 0.0
        %265 = vmatpush2.msra.mxu0 0.0
        %266 = vmatprep.mubr.f32.mxu0 0.0
        %267 = vmatmul.mubr.f32.gmra.mxu0 %v185
        %v268 = vpop.f32.mrf.mxu0
        %v269 = vadd.f32 0.0, %v268
        %v270 = vpop.f32.mrf.mxu0
        %v271 = vadd.f32 0.0, %v270
        %272 = vmatprep.mubr.f32.mxu0 0.0
        %273 = vmatmul.mubr.f32.gmra.mxu0 %v188
        %v274 = vpop.f32.mrf.mxu0
        %v275 = vadd.f32 0.0, %v274
        %v276 = vpop.f32.mrf.mxu0
        %v277 = vadd.f32 0.0, %v276
        %278 = vmatprep.mubr.f32.mxu0 0.0
        %279 = vmatmul.mubr.f32.gmra.mxu0 %v191
        %v280 = vpop.f32.mrf.mxu0
        %v281 = vadd.f32 0.0, %v280
        %v282 = vpop.f32.mrf.mxu0
        %v283 = vadd.f32 0.0, %v282
        %284 = vmatprep.mubr.f32.mxu0 0.0
        %285 = vmatmul.mubr.f32.gmra.mxu0 %v194
        %v286 = vpop.f32.mrf.mxu0
        %v287 = vadd.f32 0.0, %v286
        %v288 = vpop.f32.mrf.mxu0
        %v289 = vadd.f32 0.0, %v288
        %290 = vmatprep.mubr.f32.mxu0 0.0
        %291 = vmatmul.mubr.f32.gmra.mxu0 %v197
        %v292 = vpop.f32.mrf.mxu0
        %v293 = vadd.f32 0.0, %v292
        %v294 = vpop.f32.mrf.mxu0
        %v295 = vadd.f32 0.0, %v294
        %296 = vmatprep.mubr.f32.mxu0 0.0
        %297 = vmatmul.mubr.f32.gmra.mxu0 %v200
        %v298 = vpop.f32.mrf.mxu0
        %v299 = vadd.f32 0.0, %v298
        %v300 = vpop.f32.mrf.mxu0
        %v301 = vadd.f32 0.0, %v300
        %302 = vdwg.mxu0
        %303 = vst [vmem:[%s161] sm:$0xff] %v269
        %304 = vst [vmem:[%s161 + $0x8] sm:$0xff] %v271
        %305 = vst [vmem:[%s161 + $0x10] sm:$0xff] %v275
        %306 = vst [vmem:[%s161 + $0x18] sm:$0xff] %v277
        %307 = vst [vmem:[%s161 + $0x20] sm:$0xff] %v281
        %308 = vst [vmem:[%s161 + $0x28] sm:$0xff] %v283
        %309 = vst [vmem:[%s161 + $0x30] sm:$0xff] %v287
        %310 = vst [vmem:[%s161 + $0x38] sm:$0xff] %v289
        %311 = vst [vmem:[%s161 + $0x40] sm:$0xff] %v293
        %312 = vst [vmem:[%s161 + $0x48] sm:$0xff] %v295
        %313 = vst [vmem:[%s161 + $0x50] sm:$0xff] %v299
        %314 = vst [vmem:[%s161 + $0x58] sm:$0xff] %v301
        %s315 = sand.u32 %s87, 1
        %s316 = scalar_lea.sflag [#allocation3], %s315
        %s317 = sand.u32 %s87, 1
        %s318 = smul.addr %s317, 96
        %s319 = scalar_lea.vmem [#allocation2], %s318
        // Predicated region
        $region29: #{tpu_custom_call.1} parent=27 // pred_check
          %p320 = pneg %p97
        $region30: #{tpu_custom_call.1} parent=27 // pred_check_branch
          %322 = sbr.rel (%p320) target = $region32
        $region31: #{tpu_custom_call.1} parent=27 // pred_region
          %s323 = smul.u32 2, %s21
          %s325 = ssub.s32 1536, 1536
          %326 = vsyncadd %s316, %s325
          %s327 = smul.addr %s20, 12
          %s328 = sadd.s32 %s323, %s327
          %s329 = smul.addr %s328, 128
          %s330 = scalar_lea.hbm %s2, %s329
          %s331 = sshll.u32 %s319, 4
          %s332 = int_to_ptr.vmem [resolvable:$true] %s331
          %337 = dma.vmem_to_hbm [thread:$0]  %s332, 1536, %s330, %s316, 256, 256, 16
        $region32: #{tpu_custom_call.1} parent=27 // pred_fallthru
          _
      $region28: #{tpu_custom_call.1} parent=5 // pred_fallthru
        _
      %p338 = scmp.le.s32.totalorder 2, %s11
      // Predicated region
      $region33: #{tpu_custom_call.1} parent=5 // pred_check
        %p339 = pneg %p338
      $region34: #{tpu_custom_call.1} parent=5 // pred_check_branch
        %341 = sbr.rel (%p339) target = $region36
      $region35: #{tpu_custom_call.1} parent=5 // pred_region
        %s342 = ssub.s32 %s11, 2
        // Predicated region
        $region37: #{tpu_custom_call.1} parent=35 // pred_check
          %p343 = pneg %p103
        $region38: #{tpu_custom_call.1} parent=35 // pred_check_branch
          %345 = sbr.rel (%p343) target = $region40
        $region39: #{tpu_custom_call.1} parent=35 // pred_region
          %s346 = sand.u32 %s88, 1
          %s347 = scalar_lea.sflag [#allocation3], %s346
          %s348 = sand.u32 %s88, 1
          %s349 = smul.addr %s348, 96
          %s350 = scalar_lea.vmem [#allocation2], %s349
          %351 = dma.done %s347, 1536
        $region40: #{tpu_custom_call.1} parent=35 // pred_fallthru
          _
      $region36: #{tpu_custom_call.1} parent=5 // pred_fallthru
        _
    $region6: #{tpu_custom_call.1} parent=1 // loop_footer
      %s15 = sadd.s32 1, %s11
    $region7: #{tpu_custom_call.1} parent=1 // loop_footer_branch
      %10 = sbr.rel target = $region3
    $region8: #{tpu_custom_call.1} parent=1 // loop_exit
      _
    %352 = vsyncpa [#allocation3], 1
    %s353 = scalar_lea.sflag [#allocation3], 1
    %354 = vsyncpa %s353, 1

</llo_original>
